<compile_context>
chip_gen: v7x
topology: tpu7x:2x2x1
jax: 0.10.0
libtpu: 0.0.40
codegen_flags: <defaults>
</compile_context>

<pallas_src>
import functools

import jax
import jax.numpy as jnp
from jax.experimental import pallas as pl
from jax.experimental.pallas import tpu as pltpu

BN_EPS = 1e-5  # torch BatchNorm1d default eps


def _vmem_spec():
    return pl.BlockSpec(memory_space=pltpu.MemorySpace.VMEM)


# ------------------------- fused forward kernel -----------------------------
def _barlow_twins_fused_kernel(y1_ref, y2_ref, wf_ref, w1t_ref, g_ref, b_ref,
                               w2t_ref, r1_ref, r2_ref, loss_ref, *,
                               n_per_view, batch_size, lambd):
    n = n_per_view
    inv_n = 1.0 / n
    inv_b = 1.0 / batch_size

    # ---- backbone stand-in: GAP (f32 lane reduce) + pooled linear (bf16 MXU) ----
    p1 = jnp.mean(y1_ref[...].astype(jnp.float32), axis=-1)            # (N, C)
    p2 = jnp.mean(y2_ref[...].astype(jnp.float32), axis=-1)            # (N, C)
    pooled = jnp.concatenate([p1, p2], axis=0).astype(jnp.bfloat16)    # (2N, C)
    r = jnp.dot(pooled, wf_ref[...],
                preferred_element_type=jnp.float32)                    # (2N, FEAT) f32
    r1_ref[...] = r[:n]
    r2_ref[...] = r[n:]

    # ---- projector: Linear -> BN1d(train, affine, per-view) -> ReLU -> Linear ----
    h = jnp.dot(r.astype(jnp.bfloat16), w1t_ref[...],
                preferred_element_type=jnp.float32)                    # (2N, HID) f32
    hid = h.shape[-1]
    hv = h.reshape(2, n, hid)
    # single-pass per-view statistics: sum and sum-of-squares in one sweep (f32)
    hsum = jnp.sum(hv, axis=1, keepdims=True)                          # (2,1,HID)
    hsq = jnp.sum(hv * hv, axis=1, keepdims=True)
    hmean = hsum * inv_n
    hvar = jnp.maximum(hsq * inv_n - hmean * hmean, 0.0)               # biased var
    scale = g_ref[...] * jax.lax.rsqrt(hvar + BN_EPS)                  # (2,1,HID)
    shift = b_ref[...] - hmean * scale
    hn = jnp.maximum(hv * scale + shift, 0.0).reshape(2 * n, hid)
    z = jnp.dot(hn.astype(jnp.bfloat16), w2t_ref[...],
                preferred_element_type=jnp.float32)                    # (2N, OUT) f32

    # ---- head: non-affine BN per view, cross-correlation, Barlow loss ----
    out_d = z.shape[-1]
    zv = z.reshape(2, n, out_d)
    zsum = jnp.sum(zv, axis=1, keepdims=True)
    zsq = jnp.sum(zv * zv, axis=1, keepdims=True)
    zmean = zsum * inv_n
    zvar = jnp.maximum(zsq * inv_n - zmean * zmean, 0.0)
    zn = (zv - zmean) * jax.lax.rsqrt(zvar + BN_EPS)                   # (2,N,OUT) f32

    # 1/batch_size folded into one operand (power-of-two scale here -> exact in bf16)
    zn1 = (zn[0] * inv_b).astype(jnp.bfloat16)                         # (N, OUT)
    zn2 = zn[1].astype(jnp.bfloat16)                                   # (N, OUT)

    # c = bn(z1).T @ bn(z2) / batch_size : contract the batch axis directly
    # (no materialized transpose), bf16 operands, f32 accumulation.
    c = jax.lax.dot_general(zn1, zn2,
                            dimension_numbers=(((0,), (0,)), ((), ())),
                            preferred_element_type=jnp.float32)        # (OUT, OUT)

    # diag(c)_j recomputed directly from the normalized views (one elementwise
    # multiply + sublane reduce) -- no (OUT,OUT) iota masks;
    # off_diag = sum(c^2) - sum(diag^2).
    diag = jnp.sum(zn1.astype(jnp.float32) * zn2.astype(jnp.float32),
                   axis=0, keepdims=True)                              # (1, OUT)
    total_sq = jnp.sum(c * c)
    on_diag = jnp.sum((diag - 1.0) ** 2)
    off_diag = total_sq - jnp.sum(diag * diag)
    loss_ref[0, 0] = on_diag + lambd * off_diag


# ------------------------------ full forward --------------------------------
def barlow_twins_forward(y1, y2, params, *, batch_size, lambd):
    """Mirrors BarlowTwins.forward: returns (r1, r2, loss)."""
    n, c, h, w = y1.shape
    hw = h * w
    feat = params["w_feat"].shape[1]
    hid = params["w1t"].shape[1]
    out_d = params["w2t"].shape[1]

    # Views stay as two separate kernel inputs (no HBM-materializing concat);
    # spatial dims flattened (free reshape); activations/weights fed in bf16
    # (MXU-native) -- BN statistics are done in f32 inside the kernel.
    y1f = y1.reshape(n, c, hw).astype(jnp.bfloat16)
    y2f = y2.reshape(n, c, hw).astype(jnp.bfloat16)
    wf = params["w_feat"].astype(jnp.bfloat16)
    w1t = params["w1t"].astype(jnp.bfloat16)
    w2t = params["w2t"].astype(jnp.bfloat16)
    gamma = params["gamma"].astype(jnp.float32)
    beta = params["beta"].astype(jnp.float32)

    kernel = functools.partial(_barlow_twins_fused_kernel,
                               n_per_view=n,
                               batch_size=float(batch_size),
                               lambd=float(lambd))

    flops = (2 * n * c * hw                       # GAP
             + 2 * (2 * n) * c * feat             # backbone matmul
             + 2 * (2 * n) * feat * hid           # projector linear 1
             + 2 * (2 * n) * hid * out_d          # projector linear 2
             + 2 * n * out_d * out_d              # cross-correlation
             + 16 * n * (hid + out_d))            # BN / ReLU elementwise (approx)
    bytes_accessed = ((y1f.size + y2f.size + wf.size + w1t.size + w2t.size) * 2
                      + (gamma.size + beta.size) * 4
                      + 2 * n * feat * 4 + 4)
    cost = pl.CostEstimate(flops=int(flops),
                           transcendentals=int(2 * (hid + out_d)),
                           bytes_accessed=int(bytes_accessed))

    r1, r2, loss = pl.pallas_call(
        kernel,
        out_shape=(jax.ShapeDtypeStruct((n, feat), jnp.float32),
                   jax.ShapeDtypeStruct((n, feat), jnp.float32),
                   jax.ShapeDtypeStruct((1, 1), jnp.float32)),
        in_specs=[_vmem_spec()] * 7,
        out_specs=(_vmem_spec(), _vmem_spec(),
                   pl.BlockSpec(memory_space=pltpu.MemorySpace.SMEM)),
        cost_estimate=cost,
    )(y1f, y2f, wf, w1t, gamma, beta, w2t)

    return r1, r2, loss[0, 0]


if __name__ == "__main__":
    # small synthetic config: args.projector = "128-128", args.lambd = 0.0051,
    # args.batch_size = 8, backbone feature dim = 128 (lane-dense dims).
    N, C, H, W = 8, 4, 16, 16
    FEAT, HID, OUT = 128, 128, 128
    LAMBD = 0.0051

    key = jax.random.PRNGKey(0)
    k_y1, k_y2, k_bb, k_w1, k_w2 = jax.random.split(key, 5)

    y1 = jax.random.normal(k_y1, (N, C, H, W), jnp.float32)
    y2 = jax.random.normal(k_y2, (N, C, H, W), jnp.float32)

    params = {
        # backbone stand-in weight (already (in, out)), stored bf16 for the MXU
        "w_feat": (jax.random.normal(k_bb, (C, FEAT), jnp.float32) * 0.1
                   ).astype(jnp.bfloat16),
        # projector Linear weights, stored pre-transposed: W.T with shape (in, out)
        "w1t": (jax.random.normal(k_w1, (FEAT, HID), jnp.float32) * 0.1
                ).astype(jnp.bfloat16),
        # BatchNorm1d affine params (torch default init: weight=1, bias=0), f32
        "gamma": jnp.ones((1, HID), jnp.float32),
        "beta": jnp.zeros((1, HID), jnp.float32),
        "w2t": (jax.random.normal(k_w2, (HID, OUT), jnp.float32) * 0.1
                ).astype(jnp.bfloat16),
    }

    fwd = jax.jit(functools.partial(barlow_twins_forward,
                                    batch_size=float(N), lambd=LAMBD))
    r1, r2, loss = fwd(y1, y2, params)
    jax.block_until_ready((r1, r2, loss))
    print("KERNEL_OK")
</pallas_src>

<mosaic_0001>
module attributes {stable_mosaic.version = 11 : i64} {
  func.func @_barlow_twins_fused_kernel(%arg0: memref<8x4x256xbf16, #tpu.memory_space<vmem>>, %arg1: memref<8x4x256xbf16, #tpu.memory_space<vmem>>, %arg2: memref<4x128xbf16, #tpu.memory_space<vmem>>, %arg3: memref<128x128xbf16, #tpu.memory_space<vmem>>, %arg4: memref<1x128xf32, #tpu.memory_space<vmem>>, %arg5: memref<1x128xf32, #tpu.memory_space<vmem>>, %arg6: memref<128x128xbf16, #tpu.memory_space<vmem>>, %arg7: memref<8x128xf32, #tpu.memory_space<vmem>>, %arg8: memref<8x128xf32, #tpu.memory_space<vmem>>, %arg9: memref<1x1xf32, #tpu.memory_space<smem>>) attributes {dimension_semantics = [], scalar_prefetch = 0 : i64, scratch_operands = 0 : i64, tpu.core_type = #tpu.core_type<tc>} {
    %c0 = arith.constant 0 : index
    %c0_0 = arith.constant 0 : index
    %c0_1 = arith.constant 0 : index
    %0 = vector.load %arg0[%c0, %c0_0, %c0_1] : memref<8x4x256xbf16, #tpu.memory_space<vmem>>, vector<8x4x256xbf16>
    %1 = arith.extf %0 : vector<8x4x256xbf16> to vector<8x4x256xf32>
    %cst = arith.constant dense<0.000000e+00> : vector<8x4xf32>
    %2 = vector.multi_reduction <add>, %1, %cst [2] : vector<8x4x256xf32> to vector<8x4xf32>
    %cst_2 = arith.constant 2.560000e+02 : f32
    %3 = vector.broadcast %cst_2 : f32 to vector<8x4xf32>
    %4 = arith.divf %2, %3 : vector<8x4xf32>
    %c0_3 = arith.constant 0 : index
    %c0_4 = arith.constant 0 : index
    %c0_5 = arith.constant 0 : index
    %5 = vector.load %arg1[%c0_3, %c0_4, %c0_5] : memref<8x4x256xbf16, #tpu.memory_space<vmem>>, vector<8x4x256xbf16>
    %6 = arith.extf %5 : vector<8x4x256xbf16> to vector<8x4x256xf32>
    %cst_6 = arith.constant dense<0.000000e+00> : vector<8x4xf32>
    %7 = vector.multi_reduction <add>, %6, %cst_6 [2] : vector<8x4x256xf32> to vector<8x4xf32>
    %cst_7 = arith.constant 2.560000e+02 : f32
    %8 = vector.broadcast %cst_7 : f32 to vector<8x4xf32>
    %9 = arith.divf %7, %8 : vector<8x4xf32>
    %10 = tpu.concatenate %4, %9 in 0 : vector<8x4xf32>, vector<8x4xf32> -> vector<16x4xf32>
    %11 = arith.truncf %10 : vector<16x4xf32> to vector<16x4xbf16>
    %c0_8 = arith.constant 0 : index
    %c0_9 = arith.constant 0 : index
    %12 = vector.load %arg2[%c0_8, %c0_9] : memref<4x128xbf16, #tpu.memory_space<vmem>>, vector<4x128xbf16>
    %cst_10 = arith.constant dense<0.000000e+00> : vector<16x128xf32>
    %13 = tpu.matmul %11, %12, %cst_10 {dimension_numbers = #tpu.dot_dimension_numbers<[1], [0], [0], [1], [0, 0, 1, 1], [], []>} : vector<16x4xbf16>, vector<4x128xbf16>, vector<16x128xf32> -> vector<16x128xf32>
    %14 = vector.extract_strided_slice %13 {offsets = [0, 0], sizes = [8, 128], strides = [1, 1]} : vector<16x128xf32> to vector<8x128xf32>
    %c0_11 = arith.constant 0 : index
    %c0_12 = arith.constant 0 : index
    %15 = vector.load %arg7[%c0_11, %c0_12] : memref<8x128xf32, #tpu.memory_space<vmem>>, vector<8x128xf32>
    tpu.vector_store %arg7[%c0_11, %c0_12], %14 {strides = array<i32>} : memref<8x128xf32, #tpu.memory_space<vmem>>, vector<8x128xf32>,
    %16 = vector.extract_strided_slice %13 {offsets = [8, 0], sizes = [8, 128], strides = [1, 1]} : vector<16x128xf32> to vector<8x128xf32>
    %c0_13 = arith.constant 0 : index
    %c0_14 = arith.constant 0 : index
    %17 = vector.load %arg8[%c0_13, %c0_14] : memref<8x128xf32, #tpu.memory_space<vmem>>, vector<8x128xf32>
    tpu.vector_store %arg8[%c0_13, %c0_14], %16 {strides = array<i32>} : memref<8x128xf32, #tpu.memory_space<vmem>>, vector<8x128xf32>,
    %18 = arith.truncf %13 : vector<16x128xf32> to vector<16x128xbf16>
    %c0_15 = arith.constant 0 : index
    %c0_16 = arith.constant 0 : index
    %19 = vector.load %arg3[%c0_15, %c0_16] : memref<128x128xbf16, #tpu.memory_space<vmem>>, vector<128x128xbf16>
    %cst_17 = arith.constant dense<0.000000e+00> : vector<16x128xf32>
    %20 = tpu.matmul %18, %19, %cst_17 {dimension_numbers = #tpu.dot_dimension_numbers<[1], [0], [0], [1], [0, 0, 1, 1], [], []>} : vector<16x128xbf16>, vector<128x128xbf16>, vector<16x128xf32> -> vector<16x128xf32>
    %21 = vector.shape_cast %20 : vector<16x128xf32> to vector<2x8x128xf32>
    %cst_18 = arith.constant dense<0.000000e+00> : vector<2x128xf32>
    %22 = vector.multi_reduction <add>, %21, %cst_18 [1] : vector<2x8x128xf32> to vector<2x128xf32>
    %23 = vector.shape_cast %22 : vector<2x128xf32> to vector<2x1x128xf32>
    %24 = arith.mulf %21, %21 : vector<2x8x128xf32>
    %cst_19 = arith.constant dense<0.000000e+00> : vector<2x128xf32>
    %25 = vector.multi_reduction <add>, %24, %cst_19 [1] : vector<2x8x128xf32> to vector<2x128xf32>
    %26 = vector.shape_cast %25 : vector<2x128xf32> to vector<2x1x128xf32>
    %cst_20 = arith.constant 1.250000e-01 : f32
    %27 = vector.broadcast %cst_20 : f32 to vector<2x1x128xf32>
    %28 = arith.mulf %23, %27 : vector<2x1x128xf32>
    %cst_21 = arith.constant 1.250000e-01 : f32
    %29 = vector.broadcast %cst_21 : f32 to vector<2x1x128xf32>
    %30 = arith.mulf %26, %29 : vector<2x1x128xf32>
    %31 = arith.mulf %28, %28 : vector<2x1x128xf32>
    %32 = arith.subf %30, %31 : vector<2x1x128xf32>
    %cst_22 = arith.constant 0.000000e+00 : f32
    %33 = vector.broadcast %cst_22 : f32 to vector<2x1x128xf32>
    %34 = arith.maximumf %32, %33 : vector<2x1x128xf32>
    %c0_23 = arith.constant 0 : index
    %c0_24 = arith.constant 0 : index
    %35 = vector.load %arg4[%c0_23, %c0_24] : memref<1x128xf32, #tpu.memory_space<vmem>>, vector<1x128xf32>
    %cst_25 = arith.constant 9.99999974E-6 : f32
    %36 = vector.broadcast %cst_25 : f32 to vector<2x1x128xf32>
    %37 = arith.addf %34, %36 : vector<2x1x128xf32>
    %38 = math.rsqrt %37 : vector<2x1x128xf32>
    %39 = vector.shape_cast %35 : vector<1x128xf32> to vector<1x1x128xf32>
    %40 = vector.broadcast %39 : vector<1x1x128xf32> to vector<2x1x128xf32>
    %41 = arith.mulf %40, %38 : vector<2x1x128xf32>
    %c0_26 = arith.constant 0 : index
    %c0_27 = arith.constant 0 : index
    %42 = vector.load %arg5[%c0_26, %c0_27] : memref<1x128xf32, #tpu.memory_space<vmem>>, vector<1x128xf32>
    %43 = arith.mulf %28, %41 : vector<2x1x128xf32>
    %44 = vector.shape_cast %42 : vector<1x128xf32> to vector<1x1x128xf32>
    %45 = vector.broadcast %44 : vector<1x1x128xf32> to vector<2x1x128xf32>
    %46 = arith.subf %45, %43 : vector<2x1x128xf32>
    %47 = vector.broadcast %41 : vector<2x1x128xf32> to vector<2x8x128xf32>
    %48 = arith.mulf %21, %47 : vector<2x8x128xf32>
    %49 = vector.broadcast %46 : vector<2x1x128xf32> to vector<2x8x128xf32>
    %50 = arith.addf %48, %49 : vector<2x8x128xf32>
    %cst_28 = arith.constant 0.000000e+00 : f32
    %51 = vector.broadcast %cst_28 : f32 to vector<2x8x128xf32>
    %52 = arith.maximumf %50, %51 : vector<2x8x128xf32>
    %53 = vector.shape_cast %52 : vector<2x8x128xf32> to vector<16x128xf32>
    %54 = arith.truncf %53 : vector<16x128xf32> to vector<16x128xbf16>
    %c0_29 = arith.constant 0 : index
    %c0_30 = arith.constant 0 : index
    %55 = vector.load %arg6[%c0_29, %c0_30] : memref<128x128xbf16, #tpu.memory_space<vmem>>, vector<128x128xbf16>
    %cst_31 = arith.constant dense<0.000000e+00> : vector<16x128xf32>
    %56 = tpu.matmul %54, %55, %cst_31 {dimension_numbers = #tpu.dot_dimension_numbers<[1], [0], [0], [1], [0, 0, 1, 1], [], []>} : vector<16x128xbf16>, vector<128x128xbf16>, vector<16x128xf32> -> vector<16x128xf32>
    %57 = vector.shape_cast %56 : vector<16x128xf32> to vector<2x8x128xf32>
    %cst_32 = arith.constant dense<0.000000e+00> : vector<2x128xf32>
    %58 = vector.multi_reduction <add>, %57, %cst_32 [1] : vector<2x8x128xf32> to vector<2x128xf32>
    %59 = vector.shape_cast %58 : vector<2x128xf32> to vector<2x1x128xf32>
    %60 = arith.mulf %57, %57 : vector<2x8x128xf32>
    %cst_33 = arith.constant dense<0.000000e+00> : vector<2x128xf32>
    %61 = vector.multi_reduction <add>, %60, %cst_33 [1] : vector<2x8x128xf32> to vector<2x128xf32>
    %62 = vector.shape_cast %61 : vector<2x128xf32> to vector<2x1x128xf32>
    %cst_34 = arith.constant 1.250000e-01 : f32
    %63 = vector.broadcast %cst_34 : f32 to vector<2x1x128xf32>
    %64 = arith.mulf %59, %63 : vector<2x1x128xf32>
    %cst_35 = arith.constant 1.250000e-01 : f32
    %65 = vector.broadcast %cst_35 : f32 to vector<2x1x128xf32>
    %66 = arith.mulf %62, %65 : vector<2x1x128xf32>
    %67 = arith.mulf %64, %64 : vector<2x1x128xf32>
    %68 = arith.subf %66, %67 : vector<2x1x128xf32>
    %cst_36 = arith.constant 0.000000e+00 : f32
    %69 = vector.broadcast %cst_36 : f32 to vector<2x1x128xf32>
    %70 = arith.maximumf %68, %69 : vector<2x1x128xf32>
    %71 = vector.broadcast %64 : vector<2x1x128xf32> to vector<2x8x128xf32>
    %72 = arith.subf %57, %71 : vector<2x8x128xf32>
    %cst_37 = arith.constant 9.99999974E-6 : f32
    %73 = vector.broadcast %cst_37 : f32 to vector<2x1x128xf32>
    %74 = arith.addf %70, %73 : vector<2x1x128xf32>
    %75 = math.rsqrt %74 : vector<2x1x128xf32>
    %76 = vector.broadcast %75 : vector<2x1x128xf32> to vector<2x8x128xf32>
    %77 = arith.mulf %72, %76 : vector<2x8x128xf32>
    %78 = vector.extract_strided_slice %77 {offsets = [0, 0, 0], sizes = [1, 8, 128], strides = [1, 1, 1]} : vector<2x8x128xf32> to vector<1x8x128xf32>
    %79 = vector.shape_cast %78 : vector<1x8x128xf32> to vector<8x128xf32>
    %cst_38 = arith.constant 1.250000e-01 : f32
    %80 = vector.broadcast %cst_38 : f32 to vector<8x128xf32>
    %81 = arith.mulf %79, %80 : vector<8x128xf32>
    %82 = arith.truncf %81 : vector<8x128xf32> to vector<8x128xbf16>
    %83 = vector.extract_strided_slice %77 {offsets = [1, 0, 0], sizes = [1, 8, 128], strides = [1, 1, 1]} : vector<2x8x128xf32> to vector<1x8x128xf32>
    %84 = vector.shape_cast %83 : vector<1x8x128xf32> to vector<8x128xf32>
    %85 = arith.truncf %84 : vector<8x128xf32> to vector<8x128xbf16>
    %cst_39 = arith.constant dense<0.000000e+00> : vector<128x128xf32>
    %86 = tpu.matmul %82, %85, %cst_39 {dimension_numbers = #tpu.dot_dimension_numbers<[0], [0], [1], [1], [0, 1, 1, 1], [], []>} : vector<8x128xbf16>, vector<8x128xbf16>, vector<128x128xf32> -> vector<128x128xf32>
    %87 = arith.extf %82 : vector<8x128xbf16> to vector<8x128xf32>
    %88 = arith.extf %85 : vector<8x128xbf16> to vector<8x128xf32>
    %89 = arith.mulf %87, %88 : vector<8x128xf32>
    %cst_40 = arith.constant dense<0.000000e+00> : vector<128xf32>
    %90 = vector.multi_reduction <add>, %89, %cst_40 [0] : vector<8x128xf32> to vector<128xf32>
    %91 = vector.shape_cast %90 : vector<128xf32> to vector<1x128xf32>
    %92 = arith.mulf %86, %86 : vector<128x128xf32>
    %93 = vector.shape_cast %92 : vector<128x128xf32> to vector<1x128x128xf32>
    %cst_41 = arith.constant dense<0.000000e+00> : vector<1xf32>
    %94 = vector.multi_reduction <add>, %93, %cst_41 [1, 2] : vector<1x128x128xf32> to vector<1xf32>
    %95 = vector.shape_cast %94 : vector<1xf32> to vector<1x1x1xf32>
    %96 = vector.extract %95[0, 0, 0] : f32 from vector<1x1x1xf32>
    %cst_42 = arith.constant 1.000000e+00 : f32
    %97 = vector.broadcast %cst_42 : f32 to vector<1x128xf32>
    %98 = arith.subf %91, %97 : vector<1x128xf32>
    %99 = arith.mulf %98, %98 : vector<1x128xf32>
    %100 = vector.shape_cast %99 : vector<1x128xf32> to vector<1x1x128xf32>
    %cst_43 = arith.constant dense<0.000000e+00> : vector<1xf32>
    %101 = vector.multi_reduction <add>, %100, %cst_43 [1, 2] : vector<1x1x128xf32> to vector<1xf32>
    %102 = vector.shape_cast %101 : vector<1xf32> to vector<1x1x1xf32>
    %103 = vector.extract %102[0, 0, 0] : f32 from vector<1x1x1xf32>
    %104 = arith.mulf %91, %91 : vector<1x128xf32>
    %105 = vector.shape_cast %104 : vector<1x128xf32> to vector<1x1x128xf32>
    %cst_44 = arith.constant dense<0.000000e+00> : vector<1xf32>
    %106 = vector.multi_reduction <add>, %105, %cst_44 [1, 2] : vector<1x1x128xf32> to vector<1xf32>
    %107 = vector.shape_cast %106 : vector<1xf32> to vector<1x1x1xf32>
    %108 = vector.extract %107[0, 0, 0] : f32 from vector<1x1x1xf32>
    %109 = arith.subf %96, %108 : f32
    %cst_45 = arith.constant 5.100000e-03 : f32
    %110 = arith.mulf %cst_45, %109 : f32
    %111 = arith.addf %103, %110 : f32
    %c0_46 = arith.constant 0 : index
    %c0_47 = arith.constant 0 : index
    %112 = memref.load %arg9[%c0_46, %c0_47] : memref<1x1xf32, #tpu.memory_space<smem>>
    memref.store %111, %arg9[%c0_46, %c0_47] : memref<1x1xf32, #tpu.memory_space<smem>>
    return
  }
}

</mosaic_0001>

<llo_original>
// kernel: barlow_twins_forward.1
$region0: #{barlow_twins_forward.1}
  #allocation0 [shape = 'u32[]', space=smem, size = 0x4, offset = 0x4, fixed_abs, tag = 'smem constant byte address 0x4 - core index']
  #allocation1 [shape = 'u32[144,128]{1,0:T(1,128)}', space=vmem, size = 0x12000, scoped, tag = 'internal scratch']
  %s0 = inlined_call_operand.vmem [shape: bf16[8,4,256], index: 0, kind: input, shape index: {}]
  %s1 = inlined_call_operand.vmem [shape: bf16[8,4,256], index: 1, kind: input, shape index: {}]
  %s2 = inlined_call_operand.vmem [shape: bf16[4,128], index: 2, kind: input, shape index: {}]
  %s3 = inlined_call_operand.vmem [shape: bf16[128,128], index: 3, kind: input, shape index: {}]
  %s4 = inlined_call_operand.vmem [shape: f32[1,128], index: 4, kind: input, shape index: {}]
  %s5 = inlined_call_operand.vmem [shape: f32[1,128], index: 5, kind: input, shape index: {}]
  %s6 = inlined_call_operand.vmem [shape: bf16[128,128], index: 6, kind: input, shape index: {}]
  %s7 = inlined_call_operand.hbm [shape: f32[8,128], index: 7, kind: output, shape index: {0}]
  %s8 = inlined_call_operand.hbm [shape: f32[8,128], index: 8, kind: output, shape index: {1}]
  %s9 = inlined_call_operand.hbm [shape: f32[1,1], index: 9, kind: output, shape index: {2}]
  %10 = xla_tuple %s7, %s8, %s9
  %s11 = sld [smem:[#allocation0]]
  $region54: #{barlow_twins_forward.1} parent=0
    _
  %s13 = ssub.s32 1, %s11
  %s14 = scalar_select 0, %s13, %s11
  $region1: #{barlow_twins_forward.1} parent=0
    #allocation2 [shape = 'u8[4096]{0}', space=vmem, size = 0x1000, scoped, tag = 'output window, operand 0, single buffered']
    #allocation3 [shape = 's32[1]{0}', space=sflag, size = 0x4, scoped, tag = 'scoped memory for barlow_twins_forward.1']
    #allocation4 [shape = 's32[1]{0}', space=sflag, size = 0x4, scoped, tag = 'scoped memory for barlow_twins_forward.1']
    #allocation5 [shape = 'u8[4096]{0}', space=vmem, size = 0x1000, scoped, tag = 'output window, operand 1, single buffered']
    #allocation6 [shape = 's32[1]{0}', space=sflag, size = 0x4, scoped, tag = 'scoped memory for barlow_twins_forward.1']
    #allocation7 [shape = 'u8[512]{0}', space=smem, size = 0x200, scoped, tag = 'output window, operand 2, single buffered']
    %15 = vsyncpa [#allocation3], 0
    %16 = vsyncpa [#allocation6], 0
    %17 = vsyncpa [#allocation4], 0
    // Predicated region
    $region2: #{barlow_twins_forward.1} parent=1 // pred_check
      _
    $region3: #{barlow_twins_forward.1} parent=1 // pred_check_branch
      %19 = sbr.rel (0) target = $region5
    $region4: #{barlow_twins_forward.1} parent=1 // pred_region
      _
    $region5: #{barlow_twins_forward.1} parent=1 // pred_fallthru
      _
    // Predicated region
    $region6: #{barlow_twins_forward.1} parent=1 // pred_check
      _
    $region7: #{barlow_twins_forward.1} parent=1 // pred_check_branch
      %21 = sbr.rel (0) target = $region9
    $region8: #{barlow_twins_forward.1} parent=1 // pred_region
      _
    $region9: #{barlow_twins_forward.1} parent=1 // pred_fallthru
      _
    // Predicated region
    $region10: #{barlow_twins_forward.1} parent=1 // pred_check
      _
    $region11: #{barlow_twins_forward.1} parent=1 // pred_check_branch
      %23 = sbr.rel (0) target = $region13
    $region12: #{barlow_twins_forward.1} parent=1 // pred_region
      _
    $region13: #{barlow_twins_forward.1} parent=1 // pred_fallthru
      _
    // Predicated region
    $region14: #{barlow_twins_forward.1} parent=1 // pred_check
      _
    $region15: #{barlow_twins_forward.1} parent=1 // pred_check_branch
      %25 = sbr.rel (0) target = $region17
    $region16: #{barlow_twins_forward.1} parent=1 // pred_region
      _
    $region17: #{barlow_twins_forward.1} parent=1 // pred_fallthru
      _
    // Predicated region
    $region18: #{barlow_twins_forward.1} parent=1 // pred_check
      _
    $region19: #{barlow_twins_forward.1} parent=1 // pred_check_branch
      %27 = sbr.rel (0) target = $region21
    $region20: #{barlow_twins_forward.1} parent=1 // pred_region
      _
    $region21: #{barlow_twins_forward.1} parent=1 // pred_fallthru
      _
    // Predicated region
    $region22: #{barlow_twins_forward.1} parent=1 // pred_check
      _
    $region23: #{barlow_twins_forward.1} parent=1 // pred_check_branch
      %29 = sbr.rel (0) target = $region25
    $region24: #{barlow_twins_forward.1} parent=1 // pred_region
      _
    $region25: #{barlow_twins_forward.1} parent=1 // pred_fallthru
      _
    // Predicated region
    $region26: #{barlow_twins_forward.1} parent=1 // pred_check
      _
    $region27: #{barlow_twins_forward.1} parent=1 // pred_check_branch
      %31 = sbr.rel (0) target = $region29
    $region28: #{barlow_twins_forward.1} parent=1 // pred_region
      _
    $region29: #{barlow_twins_forward.1} parent=1 // pred_fallthru
      _
    %v33 = vld [vmem:[%s0] sm:$0xf]
    %v34 = vld [vmem:[%s0 + $0x4] sm:$0xf]
    %v35 = vld [vmem:[%s0 + $0x8] sm:$0xf]
    %v36 = vld [vmem:[%s0 + $0xc] sm:$0xf]
    %v37 = vld [vmem:[%s0 + $0x10] sm:$0xf]
    %v38 = vld [vmem:[%s0 + $0x14] sm:$0xf]
    %v39 = vld [vmem:[%s0 + $0x18] sm:$0xf]
    %v40 = vld [vmem:[%s0 + $0x1c] sm:$0xf]
    %v41 = vunpack.c.l.bf16 %v33
    %v42 = vunpack.c.l.bf16 %v34
    %v43 = vunpack.c.l.bf16 %v35
    %v44 = vunpack.c.l.bf16 %v36
    %v45 = vunpack.c.l.bf16 %v37
    %v46 = vunpack.c.l.bf16 %v38
    %v47 = vunpack.c.l.bf16 %v39
    %v48 = vunpack.c.l.bf16 %v40
    %v57 = vcombine.high %v41, %v41
    %v58 = vcombine.high %v42, %v42
    %v59 = vcombine.high %v43, %v43
    %v60 = vcombine.high %v44, %v44
    %v61 = vcombine.high %v45, %v45
    %v62 = vcombine.high %v46, %v46
    %v63 = vcombine.high %v47, %v47
    %v64 = vcombine.high %v48, %v48
    %vm73 = vcmask 1043456
    %v74 = vsel %vm73, %v41, 0.0
    %v75 = vsel %vm73, %v57, 0.0
    %v76 = vadd.f32 %v74, %v75
    %77 = vadd.xlane.f32.xlu0 %v76
    %v78 = vpop.xlane.xlu0 %77
    %v79 = vsel %vm73, %v42, 0.0
    %v80 = vsel %vm73, %v58, 0.0
    %v81 = vadd.f32 %v79, %v80
    %82 = vadd.xlane.f32.xlu0 %v81
    %v83 = vpop.xlane.xlu0 %82
    %v84 = vsel %vm73, %v43, 0.0
    %v85 = vsel %vm73, %v59, 0.0
    %v86 = vadd.f32 %v84, %v85
    %87 = vadd.xlane.f32.xlu0 %v86
    %v88 = vpop.xlane.xlu0 %87
    %v89 = vsel %vm73, %v44, 0.0
    %v90 = vsel %vm73, %v60, 0.0
    %v91 = vadd.f32 %v89, %v90
    %92 = vadd.xlane.f32.xlu0 %v91
    %v93 = vpop.xlane.xlu0 %92
    %v94 = vsel %vm73, %v45, 0.0
    %v95 = vsel %vm73, %v61, 0.0
    %v96 = vadd.f32 %v94, %v95
    %97 = vadd.xlane.f32.xlu0 %v96
    %v98 = vpop.xlane.xlu0 %97
    %v99 = vsel %vm73, %v46, 0.0
    %v100 = vsel %vm73, %v62, 0.0
    %v101 = vadd.f32 %v99, %v100
    %102 = vadd.xlane.f32.xlu0 %v101
    %v103 = vpop.xlane.xlu0 %102
    %v104 = vsel %vm73, %v47, 0.0
    %v105 = vsel %vm73, %v63, 0.0
    %v106 = vadd.f32 %v104, %v105
    %107 = vadd.xlane.f32.xlu0 %v106
    %v108 = vpop.xlane.xlu0 %107
    %v109 = vsel %vm73, %v48, 0.0
    %v110 = vsel %vm73, %v64, 0.0
    %v111 = vadd.f32 %v109, %v110
    %112 = vadd.xlane.f32.xlu0 %v111
    %v113 = vpop.xlane.xlu0 %112
    %v114 = vrcp.pop 256.0
    %v115 = vmul.f32 %v78, %v114
    %v116 = vmul.f32 %v83, %v114
    %v117 = vmul.f32 %v88, %v114
    %v118 = vmul.f32 %v93, %v114
    %v119 = vmul.f32 %v98, %v114
    %v120 = vmul.f32 %v103, %v114
    %v121 = vmul.f32 %v108, %v114
    %v122 = vmul.f32 %v113, %v114
    %v123 = vld [vmem:[%s1] sm:$0xf]
    %v124 = vld [vmem:[%s1 + $0x4] sm:$0xf]
    %v125 = vld [vmem:[%s1 + $0x8] sm:$0xf]
    %v126 = vld [vmem:[%s1 + $0xc] sm:$0xf]
    %v127 = vld [vmem:[%s1 + $0x10] sm:$0xf]
    %v128 = vld [vmem:[%s1 + $0x14] sm:$0xf]
    %v129 = vld [vmem:[%s1 + $0x18] sm:$0xf]
    %v130 = vld [vmem:[%s1 + $0x1c] sm:$0xf]
    %v131 = vunpack.c.l.bf16 %v123
    %v132 = vunpack.c.l.bf16 %v124
    %v133 = vunpack.c.l.bf16 %v125
    %v134 = vunpack.c.l.bf16 %v126
    %v135 = vunpack.c.l.bf16 %v127
    %v136 = vunpack.c.l.bf16 %v128
    %v137 = vunpack.c.l.bf16 %v129
    %v138 = vunpack.c.l.bf16 %v130
    %v147 = vcombine.high %v131, %v131
    %v148 = vcombine.high %v132, %v132
    %v149 = vcombine.high %v133, %v133
    %v150 = vcombine.high %v134, %v134
    %v151 = vcombine.high %v135, %v135
    %v152 = vcombine.high %v136, %v136
    %v153 = vcombine.high %v137, %v137
    %v154 = vcombine.high %v138, %v138
    %v163 = vsel %vm73, %v131, 0.0
    %v164 = vsel %vm73, %v147, 0.0
    %v165 = vadd.f32 %v163, %v164
    %166 = vadd.xlane.f32.xlu0 %v165
    %v167 = vpop.xlane.xlu0 %166
    %v168 = vsel %vm73, %v132, 0.0
    %v169 = vsel %vm73, %v148, 0.0
    %v170 = vadd.f32 %v168, %v169
    %171 = vadd.xlane.f32.xlu0 %v170
    %v172 = vpop.xlane.xlu0 %171
    %v173 = vsel %vm73, %v133, 0.0
    %v174 = vsel %vm73, %v149, 0.0
    %v175 = vadd.f32 %v173, %v174
    %176 = vadd.xlane.f32.xlu0 %v175
    %v177 = vpop.xlane.xlu0 %176
    %v178 = vsel %vm73, %v134, 0.0
    %v179 = vsel %vm73, %v150, 0.0
    %v180 = vadd.f32 %v178, %v179
    %181 = vadd.xlane.f32.xlu0 %v180
    %v182 = vpop.xlane.xlu0 %181
    %v183 = vsel %vm73, %v135, 0.0
    %v184 = vsel %vm73, %v151, 0.0
    %v185 = vadd.f32 %v183, %v184
    %186 = vadd.xlane.f32.xlu0 %v185
    %v187 = vpop.xlane.xlu0 %186
    %v188 = vsel %vm73, %v136, 0.0
    %v189 = vsel %vm73, %v152, 0.0
    %v190 = vadd.f32 %v188, %v189
    %191 = vadd.xlane.f32.xlu0 %v190
    %v192 = vpop.xlane.xlu0 %191
    %v193 = vsel %vm73, %v137, 0.0
    %v194 = vsel %vm73, %v153, 0.0
    %v195 = vadd.f32 %v193, %v194
    %196 = vadd.xlane.f32.xlu0 %v195
    %v197 = vpop.xlane.xlu0 %196
    %v198 = vsel %vm73, %v138, 0.0
    %v199 = vsel %vm73, %v154, 0.0
    %v200 = vadd.f32 %v198, %v199
    %201 = vadd.xlane.f32.xlu0 %v200
    %v202 = vpop.xlane.xlu0 %201
    %v203 = vmul.f32 %v167, %v114
    %v204 = vmul.f32 %v172, %v114
    %v205 = vmul.f32 %v177, %v114
    %v206 = vmul.f32 %v182, %v114
    %v207 = vmul.f32 %v187, %v114
    %v208 = vmul.f32 %v192, %v114
    %v209 = vmul.f32 %v197, %v114
    %v210 = vmul.f32 %v202, %v114
    %v219 = vlaneseq
    %v220 = vand.u32 %v219, 127
    %v221 = vlaneseq
    %v222 = vshrl.u32 %v221, 7
    %v223 = vsub.s32 %v220, %v222
    %v224 = vrot.slane %v115, %v223
    %v225 = vlaneseq
    %v226 = vshrl.u32 %v225, 7
    %v227 = vsub.s32 %v220, %v226
    %v228 = vrot.slane %v116, %v227
    %v229 = vlaneseq
    %v230 = vshrl.u32 %v229, 7
    %v231 = vsub.s32 %v220, %v230
    %v232 = vrot.slane %v117, %v231
    %v233 = vlaneseq
    %v234 = vshrl.u32 %v233, 7
    %v235 = vsub.s32 %v220, %v234
    %v236 = vrot.slane %v118, %v235
    %v237 = vlaneseq
    %v238 = vshrl.u32 %v237, 7
    %v239 = vsub.s32 %v220, %v238
    %v240 = vrot.slane %v119, %v239
    %v241 = vlaneseq
    %v242 = vshrl.u32 %v241, 7
    %v243 = vsub.s32 %v220, %v242
    %v244 = vrot.slane %v120, %v243
    %v245 = vlaneseq
    %v246 = vshrl.u32 %v245, 7
    %v247 = vsub.s32 %v220, %v246
    %v248 = vrot.slane %v121, %v247
    %v249 = vlaneseq
    %v250 = vshrl.u32 %v249, 7
    %v251 = vsub.s32 %v220, %v250
    %v252 = vrot.slane %v122, %v251
    %vm253 = vcmask 1041409
    %v254 = vsel %vm253, %v228, %v224
    %vm255 = vcmask 1042434
    %v256 = vsel %vm255, %v232, %v254
    %vm257 = vcmask 1043459
    %v258 = vsel %vm257, %v236, %v256
    %vm259 = vcmask 1044484
    %v260 = vsel %vm259, %v240, %v258
    %vm261 = vcmask 1045509
    %v262 = vsel %vm261, %v244, %v260
    %vm263 = vcmask 1046534
    %v264 = vsel %vm263, %v248, %v262
    %vm265 = vcmask 1047559
    %v266 = vsel %vm265, %v252, %v264
    %v276 = vlaneseq
    %v277 = vshrl.u32 %v276, 7
    %v278 = vsub.s32 %v220, %v277
    %v279 = vrot.slane %v203, %v278
    %v280 = vlaneseq
    %v281 = vshrl.u32 %v280, 7
    %v282 = vsub.s32 %v220, %v281
    %v283 = vrot.slane %v204, %v282
    %v284 = vlaneseq
    %v285 = vshrl.u32 %v284, 7
    %v286 = vsub.s32 %v220, %v285
    %v287 = vrot.slane %v205, %v286
    %v288 = vlaneseq
    %v289 = vshrl.u32 %v288, 7
    %v290 = vsub.s32 %v220, %v289
    %v291 = vrot.slane %v206, %v290
    %v292 = vlaneseq
    %v293 = vshrl.u32 %v292, 7
    %v294 = vsub.s32 %v220, %v293
    %v295 = vrot.slane %v207, %v294
    %v296 = vlaneseq
    %v297 = vshrl.u32 %v296, 7
    %v298 = vsub.s32 %v220, %v297
    %v299 = vrot.slane %v208, %v298
    %v300 = vlaneseq
    %v301 = vshrl.u32 %v300, 7
    %v302 = vsub.s32 %v220, %v301
    %v303 = vrot.slane %v209, %v302
    %v304 = vlaneseq
    %v305 = vshrl.u32 %v304, 7
    %v306 = vsub.s32 %v220, %v305
    %v307 = vrot.slane %v210, %v306
    %v308 = vsel %vm253, %v283, %v279
    %v309 = vsel %vm255, %v287, %v308
    %v310 = vsel %vm257, %v291, %v309
    %v311 = vsel %vm259, %v295, %v310
    %v312 = vsel %vm261, %v299, %v311
    %v313 = vsel %vm263, %v303, %v312
    %v314 = vsel %vm265, %v307, %v313
    %v316 = vpack.c.bf16 %v314, %v266
    %v317 = vld [vmem:[%s2] sm:$0x3]
    %vm318 = vcmask 31744
    %v320 = vsel %vm318, %v316, 0
    %vm322 = vcmask 1041408
    %v324 = vsel %vm322, %v317, 0
    %326 = vmatprep.subr.bf16.mxu0 0
    %327 = vmatpush1.bf16.msra.mxu0 %v324
    %328 = vmatprep.subr.bf16.mxu0 0
    %329 = vmatpush1.bf16.msra.mxu0 0
    %330 = vmatprep.subr.bf16.mxu0 0
    %331 = vmatpush1.bf16.msra.mxu0 0
    %332 = vmatprep.subr.bf16.mxu0 0
    %333 = vmatpush1.bf16.msra.mxu0 0
    %334 = vmatprep.subr.bf16.mxu0 0
    %335 = vmatpush1.bf16.msra.mxu0 0
    %336 = vmatprep.subr.bf16.mxu0 0
    %337 = vmatpush1.bf16.msra.mxu0 0
    %338 = vmatprep.subr.bf16.mxu0 0
    %339 = vmatpush1.bf16.msra.mxu0 0
    %340 = vmatprep.subr.bf16.mxu0 0
    %341 = vmatpush1.bf16.msra.mxu0 0
    %342 = vmatprep.subr.bf16.mxu0 0
    %343 = vmatpush1.bf16.msra.mxu0 0
    %344 = vmatprep.subr.bf16.mxu0 0
    %345 = vmatpush1.bf16.msra.mxu0 0
    %346 = vmatprep.subr.bf16.mxu0 0
    %347 = vmatpush1.bf16.msra.mxu0 0
    %348 = vmatprep.subr.bf16.mxu0 0
    %349 = vmatpush1.bf16.msra.mxu0 0
    %350 = vmatprep.subr.bf16.mxu0 0
    %351 = vmatpush1.bf16.msra.mxu0 0
    %352 = vmatprep.subr.bf16.mxu0 0
    %353 = vmatpush1.bf16.msra.mxu0 0
    %354 = vmatprep.subr.bf16.mxu0 0
    %355 = vmatpush1.bf16.msra.mxu0 0
    %356 = vmatprep.subr.bf16.mxu0 0
    %357 = vmatpush1.bf16.msra.mxu0 0
    %358 = vmatprep.mubr.bf16.mxu0 0
    %359 = vmatmul.mubr.bf16.gmra.mrb[0].mxu0 %v320
    %v360 = vpop.f32.mrb[0].mxu0
    %v361 = vadd.f32 0.0, %v360
    %v362 = vpop.f32.mrb[0].mxu0
    %v363 = vpop.f32.mrb[0].mxu0
    %v364 = vadd.f32 0.0, %v363
    %v365 = vpop.f32.mrb[0].mxu0
    %366 = vdwg.mxu0
    %367 = vst [vmem:[#allocation2] sm:$0xff] %v361
    %368 = vst [vmem:[#allocation5] sm:$0xff] %v364
    %v369 = vpack.c.bf16 %v364, %v361
    %v370 = vld [vmem:[%s3] sm:$0xf]
    %v371 = vld [vmem:[%s3 + $0x4] sm:$0xf]
    %v372 = vld [vmem:[%s3 + $0x8] sm:$0xf]
    %v373 = vld [vmem:[%s3 + $0xc] sm:$0xf]
    %v374 = vld [vmem:[%s3 + $0x10] sm:$0xf]
    %v375 = vld [vmem:[%s3 + $0x14] sm:$0xf]
    %v376 = vld [vmem:[%s3 + $0x18] sm:$0xf]
    %v377 = vld [vmem:[%s3 + $0x1c] sm:$0xf]
    %v378 = vld [vmem:[%s3 + $0x20] sm:$0xf]
    %v379 = vld [vmem:[%s3 + $0x24] sm:$0xf]
    %v380 = vld [vmem:[%s3 + $0x28] sm:$0xf]
    %v381 = vld [vmem:[%s3 + $0x2c] sm:$0xf]
    %v382 = vld [vmem:[%s3 + $0x30] sm:$0xf]
    %v383 = vld [vmem:[%s3 + $0x34] sm:$0xf]
    %v384 = vld [vmem:[%s3 + $0x38] sm:$0xf]
    %v385 = vld [vmem:[%s3 + $0x3c] sm:$0xf]
    %v402 = vunpack.c.l.b16 %v370
    %v403 = vunpack.c.l.b16 %v371
    %v404 = vunpack.c.l.b16 %v372
    %v405 = vunpack.c.l.b16 %v373
    %v406 = vunpack.c.l.b16 %v374
    %v407 = vunpack.c.l.b16 %v375
    %v408 = vunpack.c.l.b16 %v376
    %v409 = vunpack.c.l.b16 %v377
    %v410 = vunpack.c.l.b16 %v378
    %v411 = vunpack.c.l.b16 %v379
    %v412 = vunpack.c.l.b16 %v380
    %v413 = vunpack.c.l.b16 %v381
    %v414 = vunpack.c.l.b16 %v382
    %v415 = vunpack.c.l.b16 %v383
    %v416 = vunpack.c.l.b16 %v384
    %v417 = vunpack.c.l.b16 %v385
    %v418 = vpack.c.b16 %v403, %v402
    %v419 = vpack.c.b16 %v405, %v404
    %v420 = vpack.c.b16 %v407, %v406
    %v421 = vpack.c.b16 %v409, %v408
    %v422 = vpack.c.b16 %v411, %v410
    %v423 = vpack.c.b16 %v413, %v412
    %v424 = vpack.c.b16 %v415, %v414
    %v425 = vpack.c.b16 %v417, %v416
    %434 = vmatprep.subr.bf16.mxu0 0
    %435 = vmatpush1.bf16.msra.mxu0 %v418
    %436 = vmatprep.subr.bf16.mxu0 0
    %437 = vmatpush1.bf16.msra.mxu0 %v419
    %438 = vmatprep.subr.bf16.mxu0 0
    %439 = vmatpush1.bf16.msra.mxu0 %v420
    %440 = vmatprep.subr.bf16.mxu0 0
    %441 = vmatpush1.bf16.msra.mxu0 %v421
    %442 = vmatprep.subr.bf16.mxu0 0
    %443 = vmatpush1.bf16.msra.mxu0 %v422
    %444 = vmatprep.subr.bf16.mxu0 0
    %445 = vmatpush1.bf16.msra.mxu0 %v423
    %446 = vmatprep.subr.bf16.mxu0 0
    %447 = vmatpush1.bf16.msra.mxu0 %v424
    %448 = vmatprep.subr.bf16.mxu0 0
    %449 = vmatpush1.bf16.msra.mxu0 %v425
    %450 = vmatprep.subr.bf16.mxu0 0
    %451 = vmatpush1.bf16.msra.mxu0 0
    %452 = vmatprep.subr.bf16.mxu0 0
    %453 = vmatpush1.bf16.msra.mxu0 0
    %454 = vmatprep.subr.bf16.mxu0 0
    %455 = vmatpush1.bf16.msra.mxu0 0
    %456 = vmatprep.subr.bf16.mxu0 0
    %457 = vmatpush1.bf16.msra.mxu0 0
    %458 = vmatprep.subr.bf16.mxu0 0
    %459 = vmatpush1.bf16.msra.mxu0 0
    %460 = vmatprep.subr.bf16.mxu0 0
    %461 = vmatpush1.bf16.msra.mxu0 0
    %462 = vmatprep.subr.bf16.mxu0 0
    %463 = vmatpush1.bf16.msra.mxu0 0
    %464 = vmatprep.subr.bf16.mxu0 0
    %465 = vmatpush1.bf16.msra.mxu0 0
    %466 = vmatprep.mubr.bf16.mxu0 0
    %467 = vmatmul.mubr.bf16.gmra.mrb[0].mxu0 %v369
    %v468 = vpop.f32.mrb[0].mxu0
    %v469 = vadd.f32 0.0, %v468
    %v470 = vpop.f32.mrb[0].mxu0
    %v471 = vpop.f32.mrb[0].mxu0
    %v472 = vadd.f32 0.0, %v471
    %v473 = vpop.f32.mrb[0].mxu0
    %474 = vdwg.mxu0
    %v475 = vrot.slane %v469, 4
    %v476 = vadd.f32 %v469, %v475
    %v477 = vrot.slane %v476, 2
    %v478 = vadd.f32 %v476, %v477
    %v479 = vrot.slane %v478, 1
    %v480 = vadd.f32 %v478, %v479
    %v481 = vrot.slane %v472, 4
    %v482 = vadd.f32 %v472, %v481
    %v483 = vrot.slane %v482, 2
    %v484 = vadd.f32 %v482, %v483
    %v485 = vrot.slane %v484, 1
    %v486 = vadd.f32 %v484, %v485
    %v487 = vmul.f32 %v469, %v469
    %v488 = vmul.f32 %v472, %v472
    %v489 = vrot.slane %v487, 4
    %v490 = vadd.f32 %v487, %v489
    %v491 = vrot.slane %v490, 2
    %v492 = vadd.f32 %v490, %v491
    %v493 = vrot.slane %v492, 1
    %v494 = vadd.f32 %v492, %v493
    %v495 = vrot.slane %v488, 4
    %v496 = vadd.f32 %v488, %v495
    %v497 = vrot.slane %v496, 2
    %v498 = vadd.f32 %v496, %v497
    %v499 = vrot.slane %v498, 1
    %v500 = vadd.f32 %v498, %v499
    %v501 = vmul.f32 %v480, 0.125
    %v502 = vmul.f32 %v486, 0.125
    %v503 = vmul.f32 %v494, 0.125
    %v504 = vmul.f32 %v500, 0.125
    %v505 = vmul.f32 %v501, %v501
    %v506 = vmul.f32 %v502, %v502
    %v507 = vsub.f32 %v503, %v505
    %v508 = vsub.f32 %v504, %v506
    %v509 = vmax.f32 %v507, 0.0
    %v510 = vmax.f32 %v508, 0.0
    %v511 = vld [vmem:[%s4] sm:$0x1]
    %v512 = vadd.f32 %v509, 1e-05
    %v513 = vadd.f32 %v510, 1e-05
    %v514 = vrsqrt.pop %v512
    %v515 = vrsqrt.pop %v513
    %v516 = vmul.f32 %v511, %v514
    %v517 = vmul.f32 %v511, %v515
    %v518 = vld [vmem:[%s5] sm:$0x1]
    %v519 = vmul.f32 %v501, %v516
    %v520 = vmul.f32 %v502, %v517
    %v521 = vsub.f32 %v518, %v519
    %v522 = vsub.f32 %v518, %v520
    %v525 = vlaneseq
    %v526 = vshrl.u32 %v525, 7
    %v527 = vsub.s32 0, %v526
    %v528 = vrot.slane %v516, %v527
    %v529 = vlaneseq
    %v530 = vshrl.u32 %v529, 7
    %v531 = vsub.s32 0, %v530
    %v532 = vrot.slane %v517, %v531
    %v535 = vmul.f32 %v469, %v528
    %v536 = vmul.f32 %v472, %v532
    %v539 = vlaneseq
    %v540 = vshrl.u32 %v539, 7
    %v541 = vsub.s32 0, %v540
    %v542 = vrot.slane %v521, %v541
    %v543 = vlaneseq
    %v544 = vshrl.u32 %v543, 7
    %v545 = vsub.s32 0, %v544
    %v546 = vrot.slane %v522, %v545
    %v549 = vadd.f32 %v535, %v542
    %v550 = vadd.f32 %v536, %v546
    %v551 = vmax.f32 %v549, 0.0
    %v552 = vmax.f32 %v550, 0.0
    %v553 = vpack.c.bf16 %v552, %v551
    %v554 = vld [vmem:[%s6] sm:$0xf]
    %v555 = vld [vmem:[%s6 + $0x4] sm:$0xf]
    %v556 = vld [vmem:[%s6 + $0x8] sm:$0xf]
    %v557 = vld [vmem:[%s6 + $0xc] sm:$0xf]
    %v558 = vld [vmem:[%s6 + $0x10] sm:$0xf]
    %v559 = vld [vmem:[%s6 + $0x14] sm:$0xf]
    %v560 = vld [vmem:[%s6 + $0x18] sm:$0xf]
    %v561 = vld [vmem:[%s6 + $0x1c] sm:$0xf]
    %v562 = vld [vmem:[%s6 + $0x20] sm:$0xf]
    %v563 = vld [vmem:[%s6 + $0x24] sm:$0xf]
    %v564 = vld [vmem:[%s6 + $0x28] sm:$0xf]
    %v565 = vld [vmem:[%s6 + $0x2c] sm:$0xf]
    %v566 = vld [vmem:[%s6 + $0x30] sm:$0xf]
    %v567 = vld [vmem:[%s6 + $0x34] sm:$0xf]
    %v568 = vld [vmem:[%s6 + $0x38] sm:$0xf]
    %v569 = vld [vmem:[%s6 + $0x3c] sm:$0xf]
    %v586 = vunpack.c.l.b16 %v554
    %v587 = vunpack.c.l.b16 %v555
    %v588 = vunpack.c.l.b16 %v556
    %v589 = vunpack.c.l.b16 %v557
    %v590 = vunpack.c.l.b16 %v558
    %v591 = vunpack.c.l.b16 %v559
    %v592 = vunpack.c.l.b16 %v560
    %v593 = vunpack.c.l.b16 %v561
    %v594 = vunpack.c.l.b16 %v562
    %v595 = vunpack.c.l.b16 %v563
    %v596 = vunpack.c.l.b16 %v564
    %v597 = vunpack.c.l.b16 %v565
    %v598 = vunpack.c.l.b16 %v566
    %v599 = vunpack.c.l.b16 %v567
    %v600 = vunpack.c.l.b16 %v568
    %v601 = vunpack.c.l.b16 %v569
    %v602 = vpack.c.b16 %v587, %v586
    %v603 = vpack.c.b16 %v589, %v588
    %v604 = vpack.c.b16 %v591, %v590
    %v605 = vpack.c.b16 %v593, %v592
    %v606 = vpack.c.b16 %v595, %v594
    %v607 = vpack.c.b16 %v597, %v596
    %v608 = vpack.c.b16 %v599, %v598
    %v609 = vpack.c.b16 %v601, %v600
    %618 = vmatprep.subr.bf16.mxu0 0
    %619 = vmatpush1.bf16.msra.mxu0 %v602
    %620 = vmatprep.subr.bf16.mxu0 0
    %621 = vmatpush1.bf16.msra.mxu0 %v603
    %622 = vmatprep.subr.bf16.mxu0 0
    %623 = vmatpush1.bf16.msra.mxu0 %v604
    %624 = vmatprep.subr.bf16.mxu0 0
    %625 = vmatpush1.bf16.msra.mxu0 %v605
    %626 = vmatprep.subr.bf16.mxu0 0
    %627 = vmatpush1.bf16.msra.mxu0 %v606
    %628 = vmatprep.subr.bf16.mxu0 0
    %629 = vmatpush1.bf16.msra.mxu0 %v607
    %630 = vmatprep.subr.bf16.mxu0 0
    %631 = vmatpush1.bf16.msra.mxu0 %v608
    %632 = vmatprep.subr.bf16.mxu0 0
    %633 = vmatpush1.bf16.msra.mxu0 %v609
    %634 = vmatprep.subr.bf16.mxu0 0
    %635 = vmatpush1.bf16.msra.mxu0 0
    %636 = vmatprep.subr.bf16.mxu0 0
    %637 = vmatpush1.bf16.msra.mxu0 0
    %638 = vmatprep.subr.bf16.mxu0 0
    %639 = vmatpush1.bf16.msra.mxu0 0
    %640 = vmatprep.subr.bf16.mxu0 0
    %641 = vmatpush1.bf16.msra.mxu0 0
    %642 = vmatprep.subr.bf16.mxu0 0
    %643 = vmatpush1.bf16.msra.mxu0 0
    %644 = vmatprep.subr.bf16.mxu0 0
    %645 = vmatpush1.bf16.msra.mxu0 0
    %646 = vmatprep.subr.bf16.mxu0 0
    %647 = vmatpush1.bf16.msra.mxu0 0
    %648 = vmatprep.subr.bf16.mxu0 0
    %649 = vmatpush1.bf16.msra.mxu0 0
    %650 = vmatprep.mubr.bf16.mxu0 0
    %651 = vmatmul.mubr.bf16.gmra.mrb[0].mxu0 %v553
    %v652 = vpop.f32.mrb[0].mxu0
    %v653 = vadd.f32 0.0, %v652
    %v654 = vpop.f32.mrb[0].mxu0
    %v655 = vpop.f32.mrb[0].mxu0
    %v656 = vadd.f32 0.0, %v655
    %v657 = vpop.f32.mrb[0].mxu0
    %658 = vdwg.mxu0
    %v659 = vrot.slane %v653, 4
    %v660 = vadd.f32 %v653, %v659
    %v661 = vrot.slane %v660, 2
    %v662 = vadd.f32 %v660, %v661
    %v663 = vrot.slane %v662, 1
    %v664 = vadd.f32 %v662, %v663
    %v665 = vrot.slane %v656, 4
    %v666 = vadd.f32 %v656, %v665
    %v667 = vrot.slane %v666, 2
    %v668 = vadd.f32 %v666, %v667
    %v669 = vrot.slane %v668, 1
    %v670 = vadd.f32 %v668, %v669
    %v671 = vmul.f32 %v653, %v653
    %v672 = vmul.f32 %v656, %v656
    %v673 = vrot.slane %v671, 4
    %v674 = vadd.f32 %v671, %v673
    %v675 = vrot.slane %v674, 2
    %v676 = vadd.f32 %v674, %v675
    %v677 = vrot.slane %v676, 1
    %v678 = vadd.f32 %v676, %v677
    %v679 = vrot.slane %v672, 4
    %v680 = vadd.f32 %v672, %v679
    %v681 = vrot.slane %v680, 2
    %v682 = vadd.f32 %v680, %v681
    %v683 = vrot.slane %v682, 1
    %v684 = vadd.f32 %v682, %v683
    %v685 = vmul.f32 %v664, 0.125
    %v686 = vmul.f32 %v670, 0.125
    %v687 = vmul.f32 %v678, 0.125
    %v688 = vmul.f32 %v684, 0.125
    %v689 = vmul.f32 %v685, %v685
    %v690 = vmul.f32 %v686, %v686
    %v691 = vsub.f32 %v687, %v689
    %v692 = vsub.f32 %v688, %v690
    %v693 = vmax.f32 %v691, 0.0
    %v694 = vmax.f32 %v692, 0.0
    %v695 = vsub.f32 %v653, %v685
    %v696 = vsub.f32 %v656, %v686
    %v697 = vadd.f32 %v693, 1e-05
    %v698 = vadd.f32 %v694, 1e-05
    %v699 = vrsqrt.pop %v697
    %v700 = vrsqrt.pop %v698
    %v701 = vmul.f32 %v695, %v699
    %v702 = vmul.f32 %v696, %v700
    %v703 = vmul.f32 %v701, 0.125
    %v704 = vpack.c.bf16 %v703, %v703
    %v705 = vpack.c.bf16 %v702, %v702
    %706 = vxpose.xlu0.c.b16.start [1/8] %v704, 128
    %707 = vxpose.xlu0.c.b16.cont [2/8] 0, 128
    %708 = vxpose.xlu0.c.b16.cont [3/8] 0, 128
    %709 = vxpose.xlu0.c.b16.cont [4/8] 0, 128
    %710 = vxpose.xlu0.c.b16.cont [5/8] 0, 128
    %711 = vxpose.xlu0.c.b16.cont [6/8] 0, 128
    %712 = vxpose.xlu0.c.b16.cont [7/8] 0, 128
    %713 = vxpose.xlu0.c.b16.end [8/8] 0, 128
    %v714 = vpop.trf.xlu0
    %v715 = vpop.trf.xlu0
    %v716 = vpop.trf.xlu0
    %v717 = vpop.trf.xlu0
    %v718 = vpop.trf.xlu0
    %v719 = vpop.trf.xlu0
    %v720 = vpop.trf.xlu0
    %v721 = vpop.trf.xlu0
    %vm722 = vcmask 64512
    %v724 = vsel %vm722, %v714, 0
    %v727 = vsel %vm722, %v715, 0
    %v730 = vsel %vm722, %v716, 0
    %v733 = vsel %vm722, %v717, 0
    %v736 = vsel %vm722, %v718, 0
    %v739 = vsel %vm722, %v719, 0
    %v742 = vsel %vm722, %v720, 0
    %v745 = vsel %vm722, %v721, 0
    %v748 = vsel %vm73, %v705, 0
    %750 = vmatprep.subr.bf16.mxu0 0
    %751 = vmatpush1.bf16.msra.mxu0 %v748
    %752 = vmatprep.subr.bf16.mxu0 0
    %753 = vmatpush1.bf16.msra.mxu0 0
    %754 = vmatprep.subr.bf16.mxu0 0
    %755 = vmatpush1.bf16.msra.mxu0 0
    %756 = vmatprep.subr.bf16.mxu0 0
    %757 = vmatpush1.bf16.msra.mxu0 0
    %758 = vmatprep.subr.bf16.mxu0 0
    %759 = vmatpush1.bf16.msra.mxu0 0
    %760 = vmatprep.subr.bf16.mxu0 0
    %761 = vmatpush1.bf16.msra.mxu0 0
    %762 = vmatprep.subr.bf16.mxu0 0
    %763 = vmatpush1.bf16.msra.mxu0 0
    %764 = vmatprep.subr.bf16.mxu0 0
    %765 = vmatpush1.bf16.msra.mxu0 0
    %766 = vmatprep.subr.bf16.mxu0 0
    %767 = vmatpush1.bf16.msra.mxu0 0
    %768 = vmatprep.subr.bf16.mxu0 0
    %769 = vmatpush1.bf16.msra.mxu0 0
    %770 = vmatprep.subr.bf16.mxu0 0
    %771 = vmatpush1.bf16.msra.mxu0 0
    %772 = vmatprep.subr.bf16.mxu0 0
    %773 = vmatpush1.bf16.msra.mxu0 0
    %774 = vmatprep.subr.bf16.mxu0 0
    %775 = vmatpush1.bf16.msra.mxu0 0
    %776 = vmatprep.subr.bf16.mxu0 0
    %777 = vmatpush1.bf16.msra.mxu0 0
    %778 = vmatprep.subr.bf16.mxu0 0
    %779 = vmatpush1.bf16.msra.mxu0 0
    %780 = vmatprep.subr.bf16.mxu0 0
    %781 = vmatpush1.bf16.msra.mxu0 0
    %782 = vmatprep.mubr.bf16.mxu0 0
    %783 = vmatmul.mubr.bf16.gmra.mrb[0].mxu0 %v724
    %v784 = vpop.f32.mrb[0].mxu0
    %v785 = vadd.f32 0.0, %v784
    %v786 = vpop.f32.mrb[0].mxu0
    %v787 = vpop.f32.mrb[0].mxu0
    %v788 = vadd.f32 0.0, %v787
    %v789 = vpop.f32.mrb[0].mxu0
    %790 = vmatprep.mubr.bf16.mxu0 0
    %791 = vmatmul.mubr.bf16.gmra.mrb[0].mxu0 %v727
    %v792 = vpop.f32.mrb[0].mxu0
    %v793 = vadd.f32 0.0, %v792
    %v794 = vpop.f32.mrb[0].mxu0
    %v795 = vpop.f32.mrb[0].mxu0
    %v796 = vadd.f32 0.0, %v795
    %v797 = vpop.f32.mrb[0].mxu0
    %798 = vmatprep.mubr.bf16.mxu0 0
    %799 = vmatmul.mubr.bf16.gmra.mrb[0].mxu0 %v730
    %v800 = vpop.f32.mrb[0].mxu0
    %v801 = vadd.f32 0.0, %v800
    %v802 = vpop.f32.mrb[0].mxu0
    %v803 = vpop.f32.mrb[0].mxu0
    %v804 = vadd.f32 0.0, %v803
    %v805 = vpop.f32.mrb[0].mxu0
    %806 = vmatprep.mubr.bf16.mxu0 0
    %807 = vmatmul.mubr.bf16.gmra.mrb[0].mxu0 %v733
    %v808 = vpop.f32.mrb[0].mxu0
    %v809 = vadd.f32 0.0, %v808
    %v810 = vpop.f32.mrb[0].mxu0
    %v811 = vpop.f32.mrb[0].mxu0
    %v812 = vadd.f32 0.0, %v811
    %v813 = vpop.f32.mrb[0].mxu0
    %814 = vmatprep.mubr.bf16.mxu0 0
    %815 = vmatmul.mubr.bf16.gmra.mrb[0].mxu0 %v736
    %v816 = vpop.f32.mrb[0].mxu0
    %v817 = vadd.f32 0.0, %v816
    %v818 = vpop.f32.mrb[0].mxu0
    %v819 = vpop.f32.mrb[0].mxu0
    %v820 = vadd.f32 0.0, %v819
    %v821 = vpop.f32.mrb[0].mxu0
    %822 = vmatprep.mubr.bf16.mxu0 0
    %823 = vmatmul.mubr.bf16.gmra.mrb[0].mxu0 %v739
    %v824 = vpop.f32.mrb[0].mxu0
    %v825 = vadd.f32 0.0, %v824
    %v826 = vpop.f32.mrb[0].mxu0
    %v827 = vpop.f32.mrb[0].mxu0
    %v828 = vadd.f32 0.0, %v827
    %v829 = vpop.f32.mrb[0].mxu0
    %830 = vmatprep.mubr.bf16.mxu0 0
    %831 = vmatmul.mubr.bf16.gmra.mrb[0].mxu0 %v742
    %v832 = vpop.f32.mrb[0].mxu0
    %v833 = vadd.f32 0.0, %v832
    %v834 = vpop.f32.mrb[0].mxu0
    %v835 = vpop.f32.mrb[0].mxu0
    %v836 = vadd.f32 0.0, %v835
    %v837 = vpop.f32.mrb[0].mxu0
    %838 = vmatprep.mubr.bf16.mxu0 0
    %839 = vmatmul.mubr.bf16.gmra.mrb[0].mxu0 %v745
    %v840 = vpop.f32.mrb[0].mxu0
    %v841 = vadd.f32 0.0, %v840
    %v842 = vpop.f32.mrb[0].mxu0
    %v843 = vpop.f32.mrb[0].mxu0
    %v844 = vadd.f32 0.0, %v843
    %v845 = vpop.f32.mrb[0].mxu0
    %846 = vdwg.mxu0
    %v847 = vunpack.c.l.bf16 %v704
    %v848 = vunpack.c.l.bf16 %v705
    %v849 = vmul.f32 %v847, %v848
    %v850 = vrot.slane %v849, 4
    %v851 = vadd.f32 %v849, %v850
    %v852 = vrot.slane %v851, 2
    %v853 = vadd.f32 %v851, %v852
    %v854 = vrot.slane %v853, 1
    %v855 = vadd.f32 %v853, %v854
    %v856 = vmul.f32 %v785, %v785
    %v857 = vmul.f32 %v788, %v788
    %v858 = vmul.f32 %v793, %v793
    %v859 = vmul.f32 %v796, %v796
    %v860 = vmul.f32 %v801, %v801
    %v861 = vmul.f32 %v804, %v804
    %v862 = vmul.f32 %v809, %v809
    %v863 = vmul.f32 %v812, %v812
    %v864 = vmul.f32 %v817, %v817
    %v865 = vmul.f32 %v820, %v820
    %v866 = vmul.f32 %v825, %v825
    %v867 = vmul.f32 %v828, %v828
    %v868 = vmul.f32 %v833, %v833
    %v869 = vmul.f32 %v836, %v836
    %v870 = vmul.f32 %v841, %v841
    %v871 = vmul.f32 %v844, %v844
    %v872 = vadd.f32 %v856, %v857
    %v873 = vadd.f32 %v872, %v858
    %v874 = vadd.f32 %v873, %v859
    %v875 = vadd.f32 %v874, %v860
    %v876 = vadd.f32 %v875, %v861
    %v877 = vadd.f32 %v876, %v862
    %v878 = vadd.f32 %v877, %v863
    %v879 = vadd.f32 %v878, %v864
    %v880 = vadd.f32 %v879, %v865
    %v881 = vadd.f32 %v880, %v866
    %v882 = vadd.f32 %v881, %v867
    %v883 = vadd.f32 %v882, %v868
    %v884 = vadd.f32 %v883, %v869
    %v885 = vadd.f32 %v884, %v870
    %v886 = vadd.f32 %v885, %v871
    %887 = vadd.xlane.f32.xlu0 %v886
    %v888 = vpop.xlane.xlu0 %887
    %v889 = vrot.slane %v888, 4
    %v890 = vadd.f32 %v888, %v889
    %v891 = vrot.slane %v890, 2
    %v892 = vadd.f32 %v890, %v891
    %v893 = vrot.slane %v892, 1
    %v894 = vadd.f32 %v892, %v893
    %s895 = vtos %v894
    %v896 = vsub.f32 %v855, 1.0
    %v897 = vmul.f32 %v896, %v896
    %vm898 = vcmask 1040384
    %v899 = vsel %vm898, %v897, 0.0
    %900 = vadd.xlane.f32.xlu0 %v899
    %v901 = vpop.xlane.xlu0 %900
    %v902 = vrot.slane %v901, 4
    %v903 = vadd.f32 %v901, %v902
    %v904 = vrot.slane %v903, 2
    %v905 = vadd.f32 %v903, %v904
    %v906 = vrot.slane %v905, 1
    %v907 = vadd.f32 %v905, %v906
    %s908 = vtos %v907
    %v909 = vmul.f32 %v855, %v855
    %v910 = vsel %vm898, %v909, 0.0
    %911 = vadd.xlane.f32.xlu0 %v910
    %v912 = vpop.xlane.xlu0 %911
    %v913 = vrot.slane %v912, 4
    %v914 = vadd.f32 %v912, %v913
    %v915 = vrot.slane %v914, 2
    %v916 = vadd.f32 %v914, %v915
    %v917 = vrot.slane %v916, 1
    %v918 = vadd.f32 %v916, %v917
    %s919 = vtos %v918
    %s920 = ssub.f32 %s895, %s919
    %s921 = smul.f32 %s920, 0.0051
    %s922 = sadd.f32 %s908, %s921
    %s923 = scalar_lea.smem [#allocation7], 0
    %924 = sst [smem:[%s923]] %s922
    // Predicated region
    $region30: #{barlow_twins_forward.1} parent=1 // pred_check
      _
    $region31: #{barlow_twins_forward.1} parent=1 // pred_check_branch
      %926 = sbr.rel (0) target = $region33
    $region32: #{barlow_twins_forward.1} parent=1 // pred_region
      %s928 = ssub.s32 128, 128
      %929 = vsyncadd [#allocation3], %s928
      %s931 = sshll.u32 [#allocation2], 4
      %s932 = int_to_ptr.vmem [resolvable:$true] %s931
      %934 = dma.vmem_to_hbm [thread:$0]  %s932, 128, %s7, [#allocation3]
    $region33: #{barlow_twins_forward.1} parent=1 // pred_fallthru
      _
    // Predicated region
    $region34: #{barlow_twins_forward.1} parent=1 // pred_check
      _
    $region35: #{barlow_twins_forward.1} parent=1 // pred_check_branch
      %936 = sbr.rel (0) target = $region37
    $region36: #{barlow_twins_forward.1} parent=1 // pred_region
      %s938 = ssub.s32 128, 128
      %939 = vsyncadd [#allocation6], %s938
      %s941 = sshll.u32 [#allocation5], 4
      %s942 = int_to_ptr.vmem [resolvable:$true] %s941
      %944 = dma.vmem_to_hbm [thread:$0]  %s942, 128, %s8, [#allocation6]
    $region37: #{barlow_twins_forward.1} parent=1 // pred_fallthru
      _
    // Predicated region
    $region38: #{barlow_twins_forward.1} parent=1 // pred_check
      _
    $region39: #{barlow_twins_forward.1} parent=1 // pred_check_branch
      %946 = sbr.rel (0) target = $region41
    $region40: #{barlow_twins_forward.1} parent=1 // pred_region
      %s948 = ssub.s32 16, 16
      %949 = vsyncadd [#allocation4], %s948
      %952 = dma.smem_to_hbm [#allocation7], 16, %s9, [#allocation4]
    $region41: #{barlow_twins_forward.1} parent=1 // pred_fallthru
      _
    // Predicated region
    $region42: #{barlow_twins_forward.1} parent=1 // pred_check
      _
    $region43: #{barlow_twins_forward.1} parent=1 // pred_check_branch
      %954 = sbr.rel (0) target = $region45
    $region44: #{barlow_twins_forward.1} parent=1 // pred_region
      %955 = dma.done [#allocation3], 128
    $region45: #{barlow_twins_forward.1} parent=1 // pred_fallthru
      _
    // Predicated region
    $region46: #{barlow_twins_forward.1} parent=1 // pred_check
      _
    $region47: #{barlow_twins_forward.1} parent=1 // pred_check_branch
      %957 = sbr.rel (0) target = $region49
    $region48: #{barlow_twins_forward.1} parent=1 // pred_region
      %958 = dma.done [#allocation6], 128
    $region49: #{barlow_twins_forward.1} parent=1 // pred_fallthru
      _
    // Predicated region
    $region50: #{barlow_twins_forward.1} parent=1 // pred_check
      _
    $region51: #{barlow_twins_forward.1} parent=1 // pred_check_branch
      %960 = sbr.rel (0) target = $region53
    $region52: #{barlow_twins_forward.1} parent=1 // pred_region
      %961 = dma.done [#allocation4], 16
    $region53: #{barlow_twins_forward.1} parent=1 // pred_fallthru
      _
    %962 = sfence
    %963 = vsyncpa [#allocation3], 1
    %964 = vsyncpa [#allocation6], 1
    %965 = vsyncpa [#allocation4], 1

</llo_original>
